<compile_context>
chip_gen: v6e
topology: v6e:2x2x1
jax: 0.10.0
libtpu: 0.0.40
codegen_flags: <defaults>
</compile_context>

<pallas_src>
import jax
import jax.numpy as jnp
from jax.experimental import pallas as pl
from jax.experimental.pallas import tpu as pltpu


# Lane-dense layout constants.
_LANES = 512            # lane-axis width of the 2-D tiles (multiple of 128)
_MAX_BLOCK_ROWS = 256   # sublane rows per grid step -> 256*512 = 128K elems/block
                        # (~2.5 MiB/step, ~5 MiB double-buffered: fits all VMEMs)


def _pmodel_kernel_vec_dt(alpha_ref, beta_ref, z_ref, dt_ref, o_ref):
    """Per-element dt.  z_ref: (3, tb, L); dt_ref / o_ref: (tb, L)."""
    alpha = alpha_ref[0]
    beta = beta_ref[0]
    z0 = z_ref[0]
    z1 = z_ref[1]
    z2 = z_ref[2]
    dt = dt_ref[...]
    o_ref[...] = z0 + z1 * dt - (alpha * z1 + beta * z2) * dt * dt


def _pmodel_kernel_scalar_dt(alpha_ref, beta_ref, dt_ref, z_ref, o_ref):
    """Scalar dt held in SMEM.  z_ref: (3, tb, L); o_ref: (tb, L)."""
    alpha = alpha_ref[0]
    beta = beta_ref[0]
    dt = dt_ref[0]
    z0 = z_ref[0]
    z1 = z_ref[1]
    z2 = z_ref[2]
    o_ref[...] = z0 + z1 * dt - (alpha * z1 + beta * z2) * (dt * dt)


def _block_rows(num_rows):
    """Rows per grid step: multiple of 8 (or == num_rows); >=2 steps when possible."""
    if num_rows <= 8:
        return num_rows
    half = -(-num_rows // 2)        # cdiv(num_rows, 2)
    half8 = -(-half // 8) * 8       # round up to a multiple of 8
    return min(_MAX_BLOCK_ROWS, half8)


@jax.jit
def pmodel_forward(z, dt, alpha, beta):
    """Pallas TPU implementation of pModel.forward.

    z:  (B, C) float32, C >= 3
    dt: scalar / size-1, (B,), or (B, 1)
    alpha, beta: shape-(1,) float32 parameters
    returns: (B, 1) float32
    """
    z = jnp.asarray(z, jnp.float32)
    B, C = z.shape
    assert C >= 3, "pModel expects at least 3 channels in z"

    alpha = jnp.asarray(alpha, jnp.float32).reshape(1)
    beta = jnp.asarray(beta, jnp.float32).reshape(1)

    L = _LANES
    R = -(-B // L)                  # cdiv(B, L)
    Bp = R * L
    pad = Bp - B
    tb = _block_rows(R)
    grid = (-(-R // tb),)           # cdiv(R, tb); ragged last block is masked

    # Channel-major, lane-dense layout: (3, R, L).
    # TODO(synk): accept channel-major z upstream to drop this transpose pass.
    zt = z[:, :3].T                 # (3, B)
    if pad:
        zt = jnp.pad(zt, ((0, 0), (0, pad)))
    zc = zt.reshape(3, R, L)

    dt_arr = jnp.asarray(dt, jnp.float32)
    scalar_dt = dt_arr.size == 1
    if not scalar_dt and dt_arr.size != B:
        raise ValueError(
            f"dt must be a scalar or have {B} elements, got shape {dt_arr.shape}")

    z_spec = pl.BlockSpec((3, tb, L), lambda i: (0, i, 0))
    row_spec = pl.BlockSpec((tb, L), lambda i: (i, 0))
    smem_spec = pl.BlockSpec(memory_space=pltpu.SMEM)

    out_shape = jax.ShapeDtypeStruct((R, L), jnp.float32)
    cparams = pltpu.CompilerParams(
        dimension_semantics=("parallel",),   # shard B-row blocks across TCs (v7x)
    )

    if scalar_dt:
        dt_s = dt_arr.reshape(1)
        out_padded = pl.pallas_call(
            _pmodel_kernel_scalar_dt,
            out_shape=out_shape,
            grid_spec=pl.GridSpec(
                grid=grid,
                in_specs=[smem_spec, smem_spec, smem_spec, z_spec],
                out_specs=row_spec,
            ),
            compiler_params=cparams,
            cost_estimate=pl.CostEstimate(
                flops=7 * B, transcendentals=0, bytes_accessed=16 * B),
        )(alpha, beta, dt_s, zc)
    else:
        dt_flat = dt_arr.reshape(B)
        if pad:
            dt_flat = jnp.pad(dt_flat, (0, pad))
        dt2 = dt_flat.reshape(R, L)
        out_padded = pl.pallas_call(
            _pmodel_kernel_vec_dt,
            out_shape=out_shape,
            grid_spec=pl.GridSpec(
                grid=grid,
                in_specs=[smem_spec, smem_spec, z_spec, row_spec],
                out_specs=row_spec,
            ),
            compiler_params=cparams,
            cost_estimate=pl.CostEstimate(
                flops=7 * B, transcendentals=0, bytes_accessed=20 * B),
        )(alpha, beta, zc, dt2)

    # Back to the PyTorch output layout (B, 1).  Row-major flatten of (R, L)
    # matches the batch ordering used when building the tiles.
    return out_padded.reshape(Bp)[:B].reshape(B, 1)


if __name__ == "__main__":
    key = jax.random.PRNGKey(0)
    kz, kdt, kz2, kdt2 = jax.random.split(key, 4)

    # Deterministic parameter init, exactly as in the PyTorch __init__.
    alpha = jnp.array([50.0], dtype=jnp.float32)
    beta = jnp.array([2500.0], dtype=jnp.float32)

    def ref_fn(z, dt):
        return (z[:, 0:1] + z[:, 1:2] * dt
                - (alpha * z[:, 1:2] + beta * z[:, 2:3]) * dt * dt)

    # Small per-element-dt case (matches the PyTorch forward call pattern).
    B, C = 8, 3
    z = jax.random.normal(kz, (B, C), dtype=jnp.float32)
    dt = jax.random.uniform(kdt, (B, 1), dtype=jnp.float32) * 0.01
    out = jax.block_until_ready(pmodel_forward(z, dt, alpha, beta))
    assert out.shape == (B, 1)
    assert jnp.allclose(out, ref_fn(z, dt), atol=1e-5, rtol=1e-5)

    # Scalar-dt fast path (dt lives in SMEM, no per-element dt stream).
    dt_s = jnp.float32(0.005)
    out_s = jax.block_until_ready(pmodel_forward(z, dt_s, alpha, beta))
    assert jnp.allclose(out_s, ref_fn(z, jnp.full((B, 1), dt_s)),
                        atol=1e-5, rtol=1e-5)

    # Ragged multi-block case (grid > 1, masked last block).
    B2 = 5000
    z2 = jax.random.normal(kz2, (B2, C), dtype=jnp.float32)
    dt2 = jax.random.uniform(kdt2, (B2, 1), dtype=jnp.float32) * 0.01
    out2 = jax.block_until_ready(pmodel_forward(z2, dt2, alpha, beta))
    assert out2.shape == (B2, 1)
    assert jnp.allclose(out2, ref_fn(z2, dt2), atol=1e-5, rtol=1e-5)

    print("KERNEL_OK")
</pallas_src>

<mosaic_0001>
module attributes {stable_mosaic.version = 11 : i64} {
  func.func @_pmodel_kernel_vec_dt(%arg0: i32, %arg1: memref<1xf32, #tpu.memory_space<smem>>, %arg2: memref<1xf32, #tpu.memory_space<smem>>, %arg3: memref<3x1x512xf32, #tpu.memory_space<vmem>>, %arg4: memref<1x512xf32, #tpu.memory_space<vmem>>, %arg5: memref<1x512xf32, #tpu.memory_space<vmem>>) attributes {dimension_semantics = [#tpu.dimension_semantics<parallel>], iteration_bounds = array<i64: 1>, scalar_prefetch = 0 : i64, scratch_operands = 0 : i64, tpu.core_type = #tpu.core_type<tc>, window_params = [{transform_indices = @transform_0, window_bounds = array<i64: 1>}, {transform_indices = @transform_1, window_bounds = array<i64: 1>}, {transform_indices = @transform_2, window_bounds = array<i64: 3, 1, 512>}, {transform_indices = @transform_3, window_bounds = array<i64: 1, 512>}, {transform_indices = @transform_4, window_bounds = array<i64: 1, 512>}]} {
    %c0 = arith.constant 0 : index
    %0 = memref.load %arg1[%c0] : memref<1xf32, #tpu.memory_space<smem>>
    %c0_0 = arith.constant 0 : index
    %1 = memref.load %arg2[%c0_0] : memref<1xf32, #tpu.memory_space<smem>>
    %c0_1 = arith.constant 0 : index
    %c0_2 = arith.constant 0 : index
    %c0_3 = arith.constant 0 : index
    %2 = vector.load %arg3[%c0_1, %c0_2, %c0_3] : memref<3x1x512xf32, #tpu.memory_space<vmem>>, vector<1x1x512xf32>
    %3 = vector.shape_cast %2 : vector<1x1x512xf32> to vector<1x512xf32>
    %c1 = arith.constant 1 : index
    %c0_4 = arith.constant 0 : index
    %c0_5 = arith.constant 0 : index
    %4 = vector.load %arg3[%c1, %c0_4, %c0_5] : memref<3x1x512xf32, #tpu.memory_space<vmem>>, vector<1x1x512xf32>
    %5 = vector.shape_cast %4 : vector<1x1x512xf32> to vector<1x512xf32>
    %c2 = arith.constant 2 : index
    %c0_6 = arith.constant 0 : index
    %c0_7 = arith.constant 0 : index
    %6 = vector.load %arg3[%c2, %c0_6, %c0_7] : memref<3x1x512xf32, #tpu.memory_space<vmem>>, vector<1x1x512xf32>
    %7 = vector.shape_cast %6 : vector<1x1x512xf32> to vector<1x512xf32>
    %c0_8 = arith.constant 0 : index
    %c0_9 = arith.constant 0 : index
    %8 = vector.load %arg4[%c0_8, %c0_9] : memref<1x512xf32, #tpu.memory_space<vmem>>, vector<1x512xf32>
    %9 = arith.mulf %5, %8 : vector<1x512xf32>
    %10 = arith.addf %3, %9 : vector<1x512xf32>
    %11 = vector.broadcast %0 : f32 to vector<1x512xf32>
    %12 = arith.mulf %11, %5 : vector<1x512xf32>
    %13 = vector.broadcast %1 : f32 to vector<1x512xf32>
    %14 = arith.mulf %13, %7 : vector<1x512xf32>
    %15 = arith.addf %12, %14 : vector<1x512xf32>
    %16 = arith.mulf %15, %8 : vector<1x512xf32>
    %17 = arith.mulf %16, %8 : vector<1x512xf32>
    %18 = arith.subf %10, %17 : vector<1x512xf32>
    %c0_10 = arith.constant 0 : index
    %c0_11 = arith.constant 0 : index
    %19 = vector.load %arg5[%c0_10, %c0_11] : memref<1x512xf32, #tpu.memory_space<vmem>>, vector<1x512xf32>
    tpu.vector_store %arg5[%c0_10, %c0_11], %18 {strides = array<i32>} : memref<1x512xf32, #tpu.memory_space<vmem>>, vector<1x512xf32>,
    return
  }
  func.func @transform_0(%arg0: i32) -> i32 {
    %c0_i32 = arith.constant 0 : i32
    %c0_i32_0 = arith.constant 0 : i32
    return %c0_i32 : i32
  }
  func.func @transform_1(%arg0: i32) -> i32 {
    %c0_i32 = arith.constant 0 : i32
    %c0_i32_0 = arith.constant 0 : i32
    return %c0_i32 : i32
  }
  func.func @transform_2(%arg0: i32) -> (i32, i32, i32) {
    %c0_i32 = arith.constant 0 : i32
    %c0_i32_0 = arith.constant 0 : i32
    %c0_i32_1 = arith.constant 0 : i32
    return %c0_i32, %arg0, %c0_i32_0 : i32, i32, i32
  }
  func.func @transform_3(%arg0: i32) -> (i32, i32) {
    %c0_i32 = arith.constant 0 : i32
    %c0_i32_0 = arith.constant 0 : i32
    return %arg0, %c0_i32 : i32, i32
  }
  func.func @transform_4(%arg0: i32) -> (i32, i32) {
    %c0_i32 = arith.constant 0 : i32
    %c0_i32_0 = arith.constant 0 : i32
    return %arg0, %c0_i32 : i32, i32
  }
}

</mosaic_0001>

<llo_original>
// kernel: pmodel_forward.1
$region0: #{pmodel_forward.1}
  #allocation0 [shape = 'u32[]', space=smem, size = 0x4, offset = 0x4, fixed_abs, tag = 'smem constant byte address 0x4 - core index']
  #allocation1 [shape = 'u32[144,128]{1,0:T(1,128)}', space=vmem, size = 0x12000, scoped, tag = 'internal scratch']
  #allocation2 [shape = 'f32[1]{0:T(128)S(6)}', space=smem, size = 0x200, scoped, tag = 'scoped memory for pmodel_forward.1']
  #allocation3 [shape = 'f32[1]{0:T(128)S(6)}', space=smem, size = 0x200, scoped, tag = 'scoped memory for pmodel_forward.1']
  %s0 = inlined_call_operand.<no memory space> [shape: f32[1], index: 0, kind: input, shape index: {}]
  %s1 = inlined_call_operand.<no memory space> [shape: f32[1], index: 1, kind: input, shape index: {}]
  %s2 = inlined_call_operand.vmem [shape: f32[3,1,512], index: 2, kind: input, shape index: {}]
  %s3 = inlined_call_operand.vmem [shape: f32[1,512], index: 3, kind: input, shape index: {}]
  %s4 = inlined_call_operand.vmem [shape: f32[1,512], index: 4, kind: output, shape index: {}]
  %s5 = sld [smem:[#allocation0]]
  $region26: #{pmodel_forward.1} parent=0
    _
  %s7 = ssub.s32 1, %s5
  %s8 = scalar_select 0, %s7, %s5
  %9 = sst [smem:[#allocation2]] %s0
  %10 = sst [smem:[#allocation3]] %s1
  // Predicated region
  $region2: #{pmodel_forward.1} parent=0 // pred_check
    _
  $region3: #{pmodel_forward.1} parent=0 // pred_check_branch
    %12 = sbr.rel (0) target = $region5
  $region4: #{pmodel_forward.1} parent=0 // pred_region
    _
  $region5: #{pmodel_forward.1} parent=0 // pred_fallthru
    _
  // Predicated region
  $region6: #{pmodel_forward.1} parent=0 // pred_check
    _
  $region7: #{pmodel_forward.1} parent=0 // pred_check_branch
    %14 = sbr.rel (0) target = $region9
  $region8: #{pmodel_forward.1} parent=0 // pred_region
    _
  $region9: #{pmodel_forward.1} parent=0 // pred_fallthru
    _
  // Predicated region
  $region10: #{pmodel_forward.1} parent=0 // pred_check
    _
  $region11: #{pmodel_forward.1} parent=0 // pred_check_branch
    %16 = sbr.rel (0) target = $region13
  $region12: #{pmodel_forward.1} parent=0 // pred_region
    _
  $region13: #{pmodel_forward.1} parent=0 // pred_fallthru
    _
  // Predicated region
  $region14: #{pmodel_forward.1} parent=0 // pred_check
    _
  $region15: #{pmodel_forward.1} parent=0 // pred_check_branch
    %18 = sbr.rel (0) target = $region17
  $region16: #{pmodel_forward.1} parent=0 // pred_region
    _
  $region17: #{pmodel_forward.1} parent=0 // pred_fallthru
    _
  %s19 = sld [smem:[#allocation2]]
  %s20 = sld [smem:[#allocation3]]
  %v21 = vld [vmem:[%s2] sm:$0xf]
  %s22 = scalar_lea.vmem %s2, 4
  %v23 = vld [vmem:[%s22] sm:$0xf]
  %s24 = scalar_lea.vmem %s2, 8
  %v25 = vld [vmem:[%s24] sm:$0xf]
  %v26 = vld [vmem:[%s3] sm:$0xf]
  %v27 = vmul.f32 %v23, %v26
  %v28 = vadd.f32 %v21, %v27
  %v29 = vstv %s19
  %v30 = vmul.f32 %v29, %v23
  %v31 = vstv %s20
  %v32 = vmul.f32 %v31, %v25
  %v33 = vadd.f32 %v30, %v32
  %v34 = vmul.f32 %v33, %v26
  %v35 = vmul.f32 %v34, %v26
  %v36 = vsub.f32 %v28, %v35
  %v37 = vlaneseq
  %vm38 = vcmp.ge.s32.totalorder %v37, 0
  %vm39 = vcmp.lt.s32.totalorder %v37, 512
  %vm40 = vmand %vm38, %vm39
  %41 = vst.msk [vmem:[%s4] sm:$0xf] %vm40, %v36
  // Predicated region
  $region18: #{pmodel_forward.1} parent=0 // pred_check
    _
  $region19: #{pmodel_forward.1} parent=0 // pred_check_branch
    %43 = sbr.rel (0) target = $region21
  $region20: #{pmodel_forward.1} parent=0 // pred_region
    _
  $region21: #{pmodel_forward.1} parent=0 // pred_fallthru
    _
  // Predicated region
  $region22: #{pmodel_forward.1} parent=0 // pred_check
    _
  $region23: #{pmodel_forward.1} parent=0 // pred_check_branch
    %45 = sbr.rel (0) target = $region25
  $region24: #{pmodel_forward.1} parent=0 // pred_region
    _
  $region25: #{pmodel_forward.1} parent=0 // pred_fallthru
    _

</llo_original>
